<compile_context>
chip_gen: v5e
topology: v5e:2x2
jax: 0.10.0
libtpu: 0.0.40
codegen_flags: <defaults>
</compile_context>

<pallas_src>
import functools

import jax
import jax.numpy as jnp
from jax.experimental import pallas as pl
from jax.experimental.pallas import tpu as pltpu


def _leaky_relu(x, slope=0.2):
    return jnp.where(x > 0, x, slope * x)


def _round_up(n, m):
    return ((n + m - 1) // m) * m


def discriminator_kernel(x_ref, w1_ref, b1_ref, w2_ref, b2_ref, w3_ref, b3_ref,
                         out_ref):
    """Fused 3-layer MLP on one batch tile.

    x_ref  : [TB, In_p]   (mxu dtype, e.g. bf16)
    w1_ref : [In_p, H]    (mxu dtype),  b1_ref : [1, H]    (f32)
    w2_ref : [H, S_p]     (mxu dtype),  b2_ref : [1, S_p]  (f32)
    w3_ref : [1, S_p]     (f32 row),    b3_ref : [1, 1]    (f32)
    out_ref: [TB, 1]      (f32)
    """
    x = x_ref[...]

    # Layer 1: Linear + LeakyReLU(0.2)   (MXU, f32 accumulate)
    h1 = jnp.dot(x, w1_ref[...], preferred_element_type=jnp.float32)
    h1 = _leaky_relu(h1 + b1_ref[...])

    # Dropout(0.2): identity at inference time.

    # Layer 2: Linear + LeakyReLU(0.2)   (padded columns stay exactly zero)
    h2 = jnp.dot(h1.astype(w2_ref.dtype), w2_ref[...],
                 preferred_element_type=jnp.float32)
    h2 = _leaky_relu(h2 + b2_ref[...])

    # Layer 3: S -> 1 as VPU multiply + lane reduction; a [S,1] RHS would
    # waste a full MXU weight-load/drain pass.
    out = jnp.sum(h2 * w3_ref[...], axis=-1, keepdims=True) + b3_ref[...]
    out_ref[...] = out.astype(out_ref.dtype)


@functools.partial(jax.jit, static_argnames=("block_b", "mxu_dtype"))
def discriminator_forward(x, w1, b1, w2, b2, w3, b3, *,
                          block_b=512, mxu_dtype=jnp.bfloat16):
    B, In = x.shape
    H = w1.shape[1]
    S = w2.shape[1]
    C = w3.shape[1]
    # Module spec fixes Class_num=1; the lane-reduction epilogue assumes it.
    assert C == 1, "Discriminator kernel implements Class_num == 1"

    # Lane-align contraction dim (286 -> 384) and hidden S (32 -> 128);
    # zero padding is numerically exact.
    In_p = _round_up(In, 128)
    S_p = _round_up(S, 128)
    # Batch tile: fill MXU rows & amortize per-grid-step overhead; pad ragged.
    tb = min(block_b, _round_up(B, 8))
    B_p = _round_up(B, tb)

    x_p = jnp.pad(x.astype(jnp.float32),
                  ((0, B_p - B), (0, In_p - In))).astype(mxu_dtype)
    w1_p = jnp.pad(w1.astype(jnp.float32),
                   ((0, In_p - In), (0, 0))).astype(mxu_dtype)
    w2_p = jnp.pad(w2.astype(jnp.float32),
                   ((0, 0), (0, S_p - S))).astype(mxu_dtype)
    b1_r = b1.reshape(1, H).astype(jnp.float32)
    b2_r = jnp.pad(b2.reshape(1, S).astype(jnp.float32),
                   ((0, 0), (0, S_p - S)))
    w3_r = jnp.pad(w3.reshape(1, S).astype(jnp.float32),   # [S,1] -> row [1,S_p]
                   ((0, 0), (0, S_p - S)))
    b3_r = b3.reshape(1, 1).astype(jnp.float32)

    grid = (B_p // tb,)

    # Batch tiled across the grid; weights/biases are small and loaded whole
    # with constant index_maps so they stay resident in VMEM across steps.
    in_specs = [
        pl.BlockSpec((tb, In_p), lambda i: (i, 0)),   # x tile
        pl.BlockSpec((In_p, H), lambda i: (0, 0)),    # w1
        pl.BlockSpec((1, H), lambda i: (0, 0)),       # b1
        pl.BlockSpec((H, S_p), lambda i: (0, 0)),     # w2
        pl.BlockSpec((1, S_p), lambda i: (0, 0)),     # b2
        pl.BlockSpec((1, S_p), lambda i: (0, 0)),     # w3 (row)
        pl.BlockSpec((1, 1), lambda i: (0, 0)),       # b3
    ]
    out_spec = pl.BlockSpec((tb, 1), lambda i: (i, 0))

    out_p = pl.pallas_call(
        discriminator_kernel,
        out_shape=jax.ShapeDtypeStruct((B_p, 1), jnp.float32),
        grid_spec=pltpu.PrefetchScalarGridSpec(
            num_scalar_prefetch=0,
            grid=grid,
            in_specs=in_specs,
            out_specs=out_spec,
        ),
        compiler_params=pltpu.CompilerParams(
            dimension_semantics=("parallel",)),
    )(x_p, w1_p, b1_r, w2_p, b2_r, w3_r, b3_r)

    return out_p[:B]


def init_params(key, input_dim=286, hidden_dim=256, s=32, class_num=1):
    """Deterministic, torch.nn.Linear-style uniform(-1/sqrt(fan_in), +) init."""
    ks = jax.random.split(key, 6)

    def linear(kw, kb, fan_in, fan_out):
        bound = 1.0 / jnp.sqrt(fan_in)
        w = jax.random.uniform(kw, (fan_in, fan_out), jnp.float32, -bound, bound)
        b = jax.random.uniform(kb, (1, fan_out), jnp.float32, -bound, bound)
        return w, b

    w1, b1 = linear(ks[0], ks[1], input_dim, hidden_dim)
    w2, b2 = linear(ks[2], ks[3], hidden_dim, s)
    w3, b3 = linear(ks[4], ks[5], s, class_num)
    return w1, b1, w2, b2, w3, b3


def reference_forward(x, w1, b1, w2, b2, w3, b3, mxu_dtype=jnp.bfloat16):
    """Pure-JAX reference with the same matmul-operand precision as the kernel."""
    h1 = jnp.dot(x.astype(mxu_dtype), w1.astype(mxu_dtype),
                 preferred_element_type=jnp.float32) + b1
    h1 = _leaky_relu(h1)
    h2 = jnp.dot(h1.astype(mxu_dtype), w2.astype(mxu_dtype),
                 preferred_element_type=jnp.float32) + b2
    h2 = _leaky_relu(h2)
    return h2 @ w3 + b3


if __name__ == "__main__":
    key = jax.random.PRNGKey(0)
    k_param, k_x = jax.random.split(key)

    # Module defaults: Input_dim=286, Hidden_dim=256, S=32, Class_num=1
    INPUT_DIM, HIDDEN_DIM, S_DIM, CLASS_NUM = 286, 256, 32, 1
    BATCH = 16

    params = init_params(k_param, INPUT_DIM, HIDDEN_DIM, S_DIM, CLASS_NUM)
    x = jax.random.normal(k_x, (BATCH, INPUT_DIM), jnp.float32)

    out = discriminator_forward(x, *params)
    out = jax.block_until_ready(out)

    ref = reference_forward(x, *params, mxu_dtype=jnp.bfloat16)
    assert out.shape == (BATCH, CLASS_NUM), out.shape
    assert jnp.allclose(out, ref, atol=2e-3, rtol=2e-3), "mismatch vs reference"

    print("KERNEL_OK")
</pallas_src>

<mosaic_0001>
module attributes {stable_mosaic.version = 11 : i64} {
  func.func @discriminator_kernel(%arg0: i32, %arg1: memref<16x384xbf16, #tpu.memory_space<vmem>>, %arg2: memref<384x256xbf16, #tpu.memory_space<vmem>>, %arg3: memref<1x256xf32, #tpu.memory_space<vmem>>, %arg4: memref<256x128xbf16, #tpu.memory_space<vmem>>, %arg5: memref<1x128xf32, #tpu.memory_space<vmem>>, %arg6: memref<1x128xf32, #tpu.memory_space<vmem>>, %arg7: memref<1x1xf32, #tpu.memory_space<vmem>>, %arg8: memref<16x1xf32, #tpu.memory_space<vmem>>) attributes {dimension_semantics = [#tpu.dimension_semantics<parallel>], iteration_bounds = array<i64: 1>, scalar_prefetch = 0 : i64, scratch_operands = 0 : i64, tpu.core_type = #tpu.core_type<tc>, window_params = [{transform_indices = @transform_0, window_bounds = array<i64: 16, 384>}, {pipeline_mode = #tpu.pipeline_mode<synchronous>, transform_indices = @transform_1, window_bounds = array<i64: 384, 256>}, {pipeline_mode = #tpu.pipeline_mode<synchronous>, transform_indices = @transform_2, window_bounds = array<i64: 1, 256>}, {pipeline_mode = #tpu.pipeline_mode<synchronous>, transform_indices = @transform_3, window_bounds = array<i64: 256, 128>}, {pipeline_mode = #tpu.pipeline_mode<synchronous>, transform_indices = @transform_4, window_bounds = array<i64: 1, 128>}, {pipeline_mode = #tpu.pipeline_mode<synchronous>, transform_indices = @transform_5, window_bounds = array<i64: 1, 128>}, {pipeline_mode = #tpu.pipeline_mode<synchronous>, transform_indices = @transform_6, window_bounds = array<i64: 1, 1>}, {transform_indices = @transform_7, window_bounds = array<i64: 16, 1>}]} {
    %c0 = arith.constant 0 : index
    %c0_0 = arith.constant 0 : index
    %0 = vector.load %arg1[%c0, %c0_0] : memref<16x384xbf16, #tpu.memory_space<vmem>>, vector<16x384xbf16>
    %c0_1 = arith.constant 0 : index
    %c0_2 = arith.constant 0 : index
    %1 = vector.load %arg2[%c0_1, %c0_2] : memref<384x256xbf16, #tpu.memory_space<vmem>>, vector<384x256xbf16>
    %cst = arith.constant dense<0.000000e+00> : vector<16x256xf32>
    %2 = tpu.matmul %0, %1, %cst {dimension_numbers = #tpu.dot_dimension_numbers<[1], [0], [0], [1], [0, 0, 1, 1], [], []>} : vector<16x384xbf16>, vector<384x256xbf16>, vector<16x256xf32> -> vector<16x256xf32>
    %c0_3 = arith.constant 0 : index
    %c0_4 = arith.constant 0 : index
    %3 = vector.load %arg3[%c0_3, %c0_4] : memref<1x256xf32, #tpu.memory_space<vmem>>, vector<1x256xf32>
    %4 = vector.broadcast %3 : vector<1x256xf32> to vector<16x256xf32>
    %5 = arith.addf %2, %4 : vector<16x256xf32>
    %cst_5 = arith.constant 0.000000e+00 : f32
    %6 = vector.broadcast %cst_5 : f32 to vector<16x256xf32>
    %7 = arith.cmpf ogt, %5, %6 : vector<16x256xf32>
    %cst_6 = arith.constant 2.000000e-01 : f32
    %8 = vector.broadcast %cst_6 : f32 to vector<16x256xf32>
    %9 = arith.mulf %8, %5 : vector<16x256xf32>
    %10 = arith.select %7, %5, %9 : vector<16x256xi1>, vector<16x256xf32>
    %11 = arith.truncf %10 : vector<16x256xf32> to vector<16x256xbf16>
    %c0_7 = arith.constant 0 : index
    %c0_8 = arith.constant 0 : index
    %12 = vector.load %arg4[%c0_7, %c0_8] : memref<256x128xbf16, #tpu.memory_space<vmem>>, vector<256x128xbf16>
    %cst_9 = arith.constant dense<0.000000e+00> : vector<16x128xf32>
    %13 = tpu.matmul %11, %12, %cst_9 {dimension_numbers = #tpu.dot_dimension_numbers<[1], [0], [0], [1], [0, 0, 1, 1], [], []>} : vector<16x256xbf16>, vector<256x128xbf16>, vector<16x128xf32> -> vector<16x128xf32>
    %c0_10 = arith.constant 0 : index
    %c0_11 = arith.constant 0 : index
    %14 = vector.load %arg5[%c0_10, %c0_11] : memref<1x128xf32, #tpu.memory_space<vmem>>, vector<1x128xf32>
    %15 = vector.broadcast %14 : vector<1x128xf32> to vector<16x128xf32>
    %16 = arith.addf %13, %15 : vector<16x128xf32>
    %cst_12 = arith.constant 0.000000e+00 : f32
    %17 = vector.broadcast %cst_12 : f32 to vector<16x128xf32>
    %18 = arith.cmpf ogt, %16, %17 : vector<16x128xf32>
    %cst_13 = arith.constant 2.000000e-01 : f32
    %19 = vector.broadcast %cst_13 : f32 to vector<16x128xf32>
    %20 = arith.mulf %19, %16 : vector<16x128xf32>
    %21 = arith.select %18, %16, %20 : vector<16x128xi1>, vector<16x128xf32>
    %c0_14 = arith.constant 0 : index
    %c0_15 = arith.constant 0 : index
    %22 = vector.load %arg6[%c0_14, %c0_15] : memref<1x128xf32, #tpu.memory_space<vmem>>, vector<1x128xf32>
    %23 = vector.broadcast %22 : vector<1x128xf32> to vector<16x128xf32>
    %24 = arith.mulf %21, %23 : vector<16x128xf32>
    %cst_16 = arith.constant dense<0.000000e+00> : vector<16xf32>
    %25 = vector.multi_reduction <add>, %24, %cst_16 [1] : vector<16x128xf32> to vector<16xf32>
    %26 = vector.shape_cast %25 : vector<16xf32> to vector<16x1xf32>
    %c0_17 = arith.constant 0 : index
    %c0_18 = arith.constant 0 : index
    %27 = vector.load %arg7[%c0_17, %c0_18] : memref<1x1xf32, #tpu.memory_space<vmem>>, vector<1x1xf32>
    %28 = vector.broadcast %27 : vector<1x1xf32> to vector<16x1xf32>
    %29 = arith.addf %26, %28 : vector<16x1xf32>
    %c0_19 = arith.constant 0 : index
    %c0_20 = arith.constant 0 : index
    %30 = vector.load %arg8[%c0_19, %c0_20] : memref<16x1xf32, #tpu.memory_space<vmem>>, vector<16x1xf32>
    tpu.vector_store %arg8[%c0_19, %c0_20], %29 {strides = array<i32>} : memref<16x1xf32, #tpu.memory_space<vmem>>, vector<16x1xf32>,
    return
  }
  func.func @transform_0(%arg0: i32) -> (i32, i32) {
    %c0_i32 = arith.constant 0 : i32
    %c0_i32_0 = arith.constant 0 : i32
    return %arg0, %c0_i32 : i32, i32
  }
  func.func @transform_1(%arg0: i32) -> (i32, i32) {
    %c0_i32 = arith.constant 0 : i32
    %c0_i32_0 = arith.constant 0 : i32
    %c0_i32_1 = arith.constant 0 : i32
    return %c0_i32, %c0_i32_0 : i32, i32
  }
  func.func @transform_2(%arg0: i32) -> (i32, i32) {
    %c0_i32 = arith.constant 0 : i32
    %c0_i32_0 = arith.constant 0 : i32
    %c0_i32_1 = arith.constant 0 : i32
    return %c0_i32, %c0_i32_0 : i32, i32
  }
  func.func @transform_3(%arg0: i32) -> (i32, i32) {
    %c0_i32 = arith.constant 0 : i32
    %c0_i32_0 = arith.constant 0 : i32
    %c0_i32_1 = arith.constant 0 : i32
    return %c0_i32, %c0_i32_0 : i32, i32
  }
  func.func @transform_4(%arg0: i32) -> (i32, i32) {
    %c0_i32 = arith.constant 0 : i32
    %c0_i32_0 = arith.constant 0 : i32
    %c0_i32_1 = arith.constant 0 : i32
    return %c0_i32, %c0_i32_0 : i32, i32
  }
  func.func @transform_5(%arg0: i32) -> (i32, i32) {
    %c0_i32 = arith.constant 0 : i32
    %c0_i32_0 = arith.constant 0 : i32
    %c0_i32_1 = arith.constant 0 : i32
    return %c0_i32, %c0_i32_0 : i32, i32
  }
  func.func @transform_6(%arg0: i32) -> (i32, i32) {
    %c0_i32 = arith.constant 0 : i32
    %c0_i32_0 = arith.constant 0 : i32
    %c0_i32_1 = arith.constant 0 : i32
    return %c0_i32, %c0_i32_0 : i32, i32
  }
  func.func @transform_7(%arg0: i32) -> (i32, i32) {
    %c0_i32 = arith.constant 0 : i32
    %c0_i32_0 = arith.constant 0 : i32
    return %arg0, %c0_i32 : i32, i32
  }
}

</mosaic_0001>

<llo_original>
// kernel: discriminator_forward.1
$region0: #{discriminator_forward.1}
  #allocation0 [shape = 'u32[]', space=smem, size = 0x4, offset = 0x4, fixed_abs, tag = 'smem constant byte address 0x4 - core index']
  #allocation1 [shape = 'u32[72,128]{1,0:T(1,128)}', space=vmem, size = 0x9000, scoped, tag = 'internal scratch']
  #allocation2 [shape = 'f32[1,1]{1,0:T(1,128)S(1)}', space=vmem, size = 0x200, scoped, tag = 'scoped memory for discriminator_forward.1']
  %s0 = inlined_call_operand.vmem [shape: bf16[16,384], index: 0, kind: input, shape index: {}]
  %s1 = inlined_call_operand.vmem [shape: bf16[384,256], index: 1, kind: input, shape index: {}]
  %s2 = inlined_call_operand.vmem [shape: f32[1,256], index: 2, kind: input, shape index: {}]
  %s3 = inlined_call_operand.vmem [shape: bf16[256,128], index: 3, kind: input, shape index: {}]
  %s4 = inlined_call_operand.vmem [shape: f32[1,128], index: 4, kind: input, shape index: {}]
  %s5 = inlined_call_operand.vmem [shape: f32[1,128], index: 5, kind: input, shape index: {}]
  %s6 = inlined_call_operand.<no memory space> [shape: f32[1,1], index: 6, kind: input, shape index: {}]
  %s7 = inlined_call_operand.vmem [shape: f32[16,1], index: 7, kind: output, shape index: {}]
  %s8 = sld [smem:[#allocation0]]
  $region38: #{discriminator_forward.1} parent=0
    _
  %s10 = ssub.s32 1, %s8
  %s11 = scalar_select 0, %s10, %s8
  %v12 = vstv %s6
  %13 = vst [vmem:[#allocation2] sm:$0x1] %v12
  // Predicated region
  $region2: #{discriminator_forward.1} parent=0 // pred_check
    _
  $region3: #{discriminator_forward.1} parent=0 // pred_check_branch
    %15 = sbr.rel (0) target = $region5
  $region4: #{discriminator_forward.1} parent=0 // pred_region
    _
  $region5: #{discriminator_forward.1} parent=0 // pred_fallthru
    _
  // Predicated region
  $region6: #{discriminator_forward.1} parent=0 // pred_check
    _
  $region7: #{discriminator_forward.1} parent=0 // pred_check_branch
    %17 = sbr.rel (0) target = $region9
  $region8: #{discriminator_forward.1} parent=0 // pred_region
    _
  $region9: #{discriminator_forward.1} parent=0 // pred_fallthru
    _
  // Predicated region
  $region10: #{discriminator_forward.1} parent=0 // pred_check
    _
  $region11: #{discriminator_forward.1} parent=0 // pred_check_branch
    %19 = sbr.rel (0) target = $region13
  $region12: #{discriminator_forward.1} parent=0 // pred_region
    _
  $region13: #{discriminator_forward.1} parent=0 // pred_fallthru
    _
  // Predicated region
  $region14: #{discriminator_forward.1} parent=0 // pred_check
    _
  $region15: #{discriminator_forward.1} parent=0 // pred_check_branch
    %21 = sbr.rel (0) target = $region17
  $region16: #{discriminator_forward.1} parent=0 // pred_region
    _
  $region17: #{discriminator_forward.1} parent=0 // pred_fallthru
    _
  // Predicated region
  $region18: #{discriminator_forward.1} parent=0 // pred_check
    _
  $region19: #{discriminator_forward.1} parent=0 // pred_check_branch
    %23 = sbr.rel (0) target = $region21
  $region20: #{discriminator_forward.1} parent=0 // pred_region
    _
  $region21: #{discriminator_forward.1} parent=0 // pred_fallthru
    _
  // Predicated region
  $region22: #{discriminator_forward.1} parent=0 // pred_check
    _
  $region23: #{discriminator_forward.1} parent=0 // pred_check_branch
    %25 = sbr.rel (0) target = $region25
  $region24: #{discriminator_forward.1} parent=0 // pred_region
    _
  $region25: #{discriminator_forward.1} parent=0 // pred_fallthru
    _
  // Predicated region
  $region26: #{discriminator_forward.1} parent=0 // pred_check
    _
  $region27: #{discriminator_forward.1} parent=0 // pred_check_branch
    %27 = sbr.rel (0) target = $region29
  $region28: #{discriminator_forward.1} parent=0 // pred_region
    _
  $region29: #{discriminator_forward.1} parent=0 // pred_fallthru
    _
  %v28 = vld [vmem:[%s0] sm:$0xff]
  %v29 = vld [vmem:[%s0 + $0x8] sm:$0xf]
  %v30 = vld [vmem:[%s0 + $0xc] sm:$0xff]
  %v31 = vld [vmem:[%s0 + $0x14] sm:$0xf]
  %v32 = vld [vmem:[%s1] sm:$0xff]
  %v33 = vld [vmem:[%s1 + $0x8] sm:$0xff]
  %v34 = vld [vmem:[%s1 + $0x10] sm:$0xff]
  %v35 = vld [vmem:[%s1 + $0x18] sm:$0xff]
  %v36 = vld [vmem:[%s1 + $0x20] sm:$0xff]
  %v37 = vld [vmem:[%s1 + $0x28] sm:$0xff]
  %v38 = vld [vmem:[%s1 + $0x30] sm:$0xff]
  %v39 = vld [vmem:[%s1 + $0x38] sm:$0xff]
  %v40 = vld [vmem:[%s1 + $0x40] sm:$0xff]
  %v41 = vld [vmem:[%s1 + $0x48] sm:$0xff]
  %v42 = vld [vmem:[%s1 + $0x50] sm:$0xff]
  %v43 = vld [vmem:[%s1 + $0x58] sm:$0xff]
  %v44 = vld [vmem:[%s1 + $0x60] sm:$0xff]
  %v45 = vld [vmem:[%s1 + $0x68] sm:$0xff]
  %v46 = vld [vmem:[%s1 + $0x70] sm:$0xff]
  %v47 = vld [vmem:[%s1 + $0x78] sm:$0xff]
  %v48 = vld [vmem:[%s1 + $0x80] sm:$0xff]
  %v49 = vld [vmem:[%s1 + $0x88] sm:$0xff]
  %v50 = vld [vmem:[%s1 + $0x90] sm:$0xff]
  %v51 = vld [vmem:[%s1 + $0x98] sm:$0xff]
  %v52 = vld [vmem:[%s1 + $0xa0] sm:$0xff]
  %v53 = vld [vmem:[%s1 + $0xa8] sm:$0xff]
  %v54 = vld [vmem:[%s1 + $0xb0] sm:$0xff]
  %v55 = vld [vmem:[%s1 + $0xb8] sm:$0xff]
  %v56 = vld [vmem:[%s1 + $0xc0] sm:$0xff]
  %v57 = vld [vmem:[%s1 + $0xc8] sm:$0xff]
  %v58 = vld [vmem:[%s1 + $0xd0] sm:$0xff]
  %v59 = vld [vmem:[%s1 + $0xd8] sm:$0xff]
  %v60 = vld [vmem:[%s1 + $0xe0] sm:$0xff]
  %v61 = vld [vmem:[%s1 + $0xe8] sm:$0xff]
  %v62 = vld [vmem:[%s1 + $0xf0] sm:$0xff]
  %v63 = vld [vmem:[%s1 + $0xf8] sm:$0xff]
  %v64 = vld [vmem:[%s1 + $0x100] sm:$0xff]
  %v65 = vld [vmem:[%s1 + $0x108] sm:$0xff]
  %v66 = vld [vmem:[%s1 + $0x110] sm:$0xff]
  %v67 = vld [vmem:[%s1 + $0x118] sm:$0xff]
  %v68 = vld [vmem:[%s1 + $0x120] sm:$0xff]
  %v69 = vld [vmem:[%s1 + $0x128] sm:$0xff]
  %v70 = vld [vmem:[%s1 + $0x130] sm:$0xff]
  %v71 = vld [vmem:[%s1 + $0x138] sm:$0xff]
  %v72 = vld [vmem:[%s1 + $0x140] sm:$0xff]
  %v73 = vld [vmem:[%s1 + $0x148] sm:$0xff]
  %v74 = vld [vmem:[%s1 + $0x150] sm:$0xff]
  %v75 = vld [vmem:[%s1 + $0x158] sm:$0xff]
  %v76 = vld [vmem:[%s1 + $0x160] sm:$0xff]
  %v77 = vld [vmem:[%s1 + $0x168] sm:$0xff]
  %v78 = vld [vmem:[%s1 + $0x170] sm:$0xff]
  %v79 = vld [vmem:[%s1 + $0x178] sm:$0xff]
  %v80 = vld [vmem:[%s2] sm:$0x3]
  %v82 = vperm.slane %v80, 0
  %v83 = vperm.slane %v80, 1
  %v90 = vunpack.c.l.b16 %v28
  %v91 = vunpack.c.h.b16 %v28
  %v92 = vunpack.c.l.b16 %v29
  %v93 = vunpack.c.l.b16 %v30
  %v94 = vunpack.c.h.b16 %v30
  %v95 = vunpack.c.l.b16 %v31
  %v96 = vpack.c.b16 %v93, %v90
  %v97 = vpack.c.b16 %v94, %v91
  %v98 = vpack.c.b16 %v95, %v92
  %v150 = vunpack.c.l.b16 %v32
  %v151 = vunpack.c.h.b16 %v32
  %v152 = vunpack.c.l.b16 %v33
  %v153 = vunpack.c.h.b16 %v33
  %v154 = vunpack.c.l.b16 %v34
  %v155 = vunpack.c.h.b16 %v34
  %v156 = vunpack.c.l.b16 %v35
  %v157 = vunpack.c.h.b16 %v35
  %v158 = vunpack.c.l.b16 %v36
  %v159 = vunpack.c.h.b16 %v36
  %v160 = vunpack.c.l.b16 %v37
  %v161 = vunpack.c.h.b16 %v37
  %v162 = vunpack.c.l.b16 %v38
  %v163 = vunpack.c.h.b16 %v38
  %v164 = vunpack.c.l.b16 %v39
  %v165 = vunpack.c.h.b16 %v39
  %v166 = vunpack.c.l.b16 %v40
  %v167 = vunpack.c.h.b16 %v40
  %v168 = vunpack.c.l.b16 %v41
  %v169 = vunpack.c.h.b16 %v41
  %v170 = vunpack.c.l.b16 %v42
  %v171 = vunpack.c.h.b16 %v42
  %v172 = vunpack.c.l.b16 %v43
  %v173 = vunpack.c.h.b16 %v43
  %v174 = vunpack.c.l.b16 %v44
  %v175 = vunpack.c.h.b16 %v44
  %v176 = vunpack.c.l.b16 %v45
  %v177 = vunpack.c.h.b16 %v45
  %v178 = vunpack.c.l.b16 %v46
  %v179 = vunpack.c.h.b16 %v46
  %v180 = vunpack.c.l.b16 %v47
  %v181 = vunpack.c.h.b16 %v47
  %v182 = vunpack.c.l.b16 %v48
  %v183 = vunpack.c.h.b16 %v48
  %v184 = vunpack.c.l.b16 %v49
  %v185 = vunpack.c.h.b16 %v49
  %v186 = vunpack.c.l.b16 %v50
  %v187 = vunpack.c.h.b16 %v50
  %v188 = vunpack.c.l.b16 %v51
  %v189 = vunpack.c.h.b16 %v51
  %v190 = vunpack.c.l.b16 %v52
  %v191 = vunpack.c.h.b16 %v52
  %v192 = vunpack.c.l.b16 %v53
  %v193 = vunpack.c.h.b16 %v53
  %v194 = vunpack.c.l.b16 %v54
  %v195 = vunpack.c.h.b16 %v54
  %v196 = vunpack.c.l.b16 %v55
  %v197 = vunpack.c.h.b16 %v55
  %v198 = vunpack.c.l.b16 %v56
  %v199 = vunpack.c.h.b16 %v56
  %v200 = vunpack.c.l.b16 %v57
  %v201 = vunpack.c.h.b16 %v57
  %v202 = vunpack.c.l.b16 %v58
  %v203 = vunpack.c.h.b16 %v58
  %v204 = vunpack.c.l.b16 %v59
  %v205 = vunpack.c.h.b16 %v59
  %v206 = vunpack.c.l.b16 %v60
  %v207 = vunpack.c.h.b16 %v60
  %v208 = vunpack.c.l.b16 %v61
  %v209 = vunpack.c.h.b16 %v61
  %v210 = vunpack.c.l.b16 %v62
  %v211 = vunpack.c.h.b16 %v62
  %v212 = vunpack.c.l.b16 %v63
  %v213 = vunpack.c.h.b16 %v63
  %v214 = vunpack.c.l.b16 %v64
  %v215 = vunpack.c.h.b16 %v64
  %v216 = vunpack.c.l.b16 %v65
  %v217 = vunpack.c.h.b16 %v65
  %v218 = vunpack.c.l.b16 %v66
  %v219 = vunpack.c.h.b16 %v66
  %v220 = vunpack.c.l.b16 %v67
  %v221 = vunpack.c.h.b16 %v67
  %v222 = vunpack.c.l.b16 %v68
  %v223 = vunpack.c.h.b16 %v68
  %v224 = vunpack.c.l.b16 %v69
  %v225 = vunpack.c.h.b16 %v69
  %v226 = vunpack.c.l.b16 %v70
  %v227 = vunpack.c.h.b16 %v70
  %v228 = vunpack.c.l.b16 %v71
  %v229 = vunpack.c.h.b16 %v71
  %v230 = vunpack.c.l.b16 %v72
  %v231 = vunpack.c.h.b16 %v72
  %v232 = vunpack.c.l.b16 %v73
  %v233 = vunpack.c.h.b16 %v73
  %v234 = vunpack.c.l.b16 %v74
  %v235 = vunpack.c.h.b16 %v74
  %v236 = vunpack.c.l.b16 %v75
  %v237 = vunpack.c.h.b16 %v75
  %v238 = vunpack.c.l.b16 %v76
  %v239 = vunpack.c.h.b16 %v76
  %v240 = vunpack.c.l.b16 %v77
  %v241 = vunpack.c.h.b16 %v77
  %v242 = vunpack.c.l.b16 %v78
  %v243 = vunpack.c.h.b16 %v78
  %v244 = vunpack.c.l.b16 %v79
  %v245 = vunpack.c.h.b16 %v79
  %v246 = vpack.c.b16 %v152, %v150
  %v247 = vpack.c.b16 %v153, %v151
  %v248 = vpack.c.b16 %v156, %v154
  %v249 = vpack.c.b16 %v157, %v155
  %v250 = vpack.c.b16 %v160, %v158
  %v251 = vpack.c.b16 %v161, %v159
  %v252 = vpack.c.b16 %v164, %v162
  %v253 = vpack.c.b16 %v165, %v163
  %v254 = vpack.c.b16 %v168, %v166
  %v255 = vpack.c.b16 %v169, %v167
  %v256 = vpack.c.b16 %v172, %v170
  %v257 = vpack.c.b16 %v173, %v171
  %v258 = vpack.c.b16 %v176, %v174
  %v259 = vpack.c.b16 %v177, %v175
  %v260 = vpack.c.b16 %v180, %v178
  %v261 = vpack.c.b16 %v181, %v179
  %v262 = vpack.c.b16 %v184, %v182
  %v263 = vpack.c.b16 %v185, %v183
  %v264 = vpack.c.b16 %v188, %v186
  %v265 = vpack.c.b16 %v189, %v187
  %v266 = vpack.c.b16 %v192, %v190
  %v267 = vpack.c.b16 %v193, %v191
  %v268 = vpack.c.b16 %v196, %v194
  %v269 = vpack.c.b16 %v197, %v195
  %v270 = vpack.c.b16 %v200, %v198
  %v271 = vpack.c.b16 %v201, %v199
  %v272 = vpack.c.b16 %v204, %v202
  %v273 = vpack.c.b16 %v205, %v203
  %v274 = vpack.c.b16 %v208, %v206
  %v275 = vpack.c.b16 %v209, %v207
  %v276 = vpack.c.b16 %v212, %v210
  %v277 = vpack.c.b16 %v213, %v211
  %v278 = vpack.c.b16 %v216, %v214
  %v279 = vpack.c.b16 %v217, %v215
  %v280 = vpack.c.b16 %v220, %v218
  %v281 = vpack.c.b16 %v221, %v219
  %v282 = vpack.c.b16 %v224, %v222
  %v283 = vpack.c.b16 %v225, %v223
  %v284 = vpack.c.b16 %v228, %v226
  %v285 = vpack.c.b16 %v229, %v227
  %v286 = vpack.c.b16 %v232, %v230
  %v287 = vpack.c.b16 %v233, %v231
  %v288 = vpack.c.b16 %v236, %v234
  %v289 = vpack.c.b16 %v237, %v235
  %v290 = vpack.c.b16 %v240, %v238
  %v291 = vpack.c.b16 %v241, %v239
  %v292 = vpack.c.b16 %v244, %v242
  %v293 = vpack.c.b16 %v245, %v243
  %342 = vmatpush.bf16.msra.mxu0 %v260
  %343 = vmatpush.bf16.msra.mxu0 %v258
  %344 = vmatpush.bf16.msra.mxu0 %v256
  %345 = vmatpush.bf16.msra.mxu0 %v254
  %346 = vmatpush.bf16.msra.mxu0 %v252
  %347 = vmatpush.bf16.msra.mxu0 %v250
  %348 = vmatpush.bf16.msra.mxu0 %v248
  %349 = vmatpush.bf16.msra.mxu0 %v246
  %350 = vmatmul.bf16.gmra.mxu0 %v96
  %v351 = vpop.f32.mrf.mxu0
  %v352 = vadd.f32 %v82, %v351
  %v353 = vpop.f32.mrf.mxu0
  %v354 = vadd.f32 %v82, %v353
  %355 = vdwg.mxu0
  %356 = vmatpush.bf16.msra.mxu0 %v276
  %357 = vmatpush.bf16.msra.mxu0 %v274
  %358 = vmatpush.bf16.msra.mxu0 %v272
  %359 = vmatpush.bf16.msra.mxu0 %v270
  %360 = vmatpush.bf16.msra.mxu0 %v268
  %361 = vmatpush.bf16.msra.mxu0 %v266
  %362 = vmatpush.bf16.msra.mxu0 %v264
  %363 = vmatpush.bf16.msra.mxu0 %v262
  %364 = vmatmul.bf16.gmra.mxu0 %v97
  %v365 = vpop.f32.mrf.mxu0
  %v366 = vadd.f32 %v352, %v365
  %v367 = vpop.f32.mrf.mxu0
  %v368 = vadd.f32 %v354, %v367
  %369 = vdwg.mxu0
  %370 = vmatpush.bf16.msra.mxu0 %v292
  %371 = vmatpush.bf16.msra.mxu0 %v290
  %372 = vmatpush.bf16.msra.mxu0 %v288
  %373 = vmatpush.bf16.msra.mxu0 %v286
  %374 = vmatpush.bf16.msra.mxu0 %v284
  %375 = vmatpush.bf16.msra.mxu0 %v282
  %376 = vmatpush.bf16.msra.mxu0 %v280
  %377 = vmatpush.bf16.msra.mxu0 %v278
  %378 = vmatmul.bf16.gmra.mxu0 %v98
  %v379 = vpop.f32.mrf.mxu0
  %v380 = vadd.f32 %v366, %v379
  %v381 = vpop.f32.mrf.mxu0
  %v382 = vadd.f32 %v368, %v381
  %383 = vdwg.mxu0
  %384 = vmatpush.bf16.msra.mxu0 %v261
  %385 = vmatpush.bf16.msra.mxu0 %v259
  %386 = vmatpush.bf16.msra.mxu0 %v257
  %387 = vmatpush.bf16.msra.mxu0 %v255
  %388 = vmatpush.bf16.msra.mxu0 %v253
  %389 = vmatpush.bf16.msra.mxu0 %v251
  %390 = vmatpush.bf16.msra.mxu0 %v249
  %391 = vmatpush.bf16.msra.mxu0 %v247
  %392 = vmatmul.bf16.gmra.mxu0 %v96
  %v393 = vpop.f32.mrf.mxu0
  %v394 = vadd.f32 %v83, %v393
  %v395 = vpop.f32.mrf.mxu0
  %v396 = vadd.f32 %v83, %v395
  %397 = vdwg.mxu0
  %398 = vmatpush.bf16.msra.mxu0 %v277
  %399 = vmatpush.bf16.msra.mxu0 %v275
  %400 = vmatpush.bf16.msra.mxu0 %v273
  %401 = vmatpush.bf16.msra.mxu0 %v271
  %402 = vmatpush.bf16.msra.mxu0 %v269
  %403 = vmatpush.bf16.msra.mxu0 %v267
  %404 = vmatpush.bf16.msra.mxu0 %v265
  %405 = vmatpush.bf16.msra.mxu0 %v263
  %406 = vmatmul.bf16.gmra.mxu0 %v97
  %v407 = vpop.f32.mrf.mxu0
  %v408 = vadd.f32 %v394, %v407
  %v409 = vpop.f32.mrf.mxu0
  %v410 = vadd.f32 %v396, %v409
  %411 = vdwg.mxu0
  %412 = vmatpush.bf16.msra.mxu0 %v293
  %413 = vmatpush.bf16.msra.mxu0 %v291
  %414 = vmatpush.bf16.msra.mxu0 %v289
  %415 = vmatpush.bf16.msra.mxu0 %v287
  %416 = vmatpush.bf16.msra.mxu0 %v285
  %417 = vmatpush.bf16.msra.mxu0 %v283
  %418 = vmatpush.bf16.msra.mxu0 %v281
  %419 = vmatpush.bf16.msra.mxu0 %v279
  %420 = vmatmul.bf16.gmra.mxu0 %v98
  %v421 = vpop.f32.mrf.mxu0
  %v422 = vadd.f32 %v408, %v421
  %v423 = vpop.f32.mrf.mxu0
  %v424 = vadd.f32 %v410, %v423
  %425 = vdwg.mxu0
  %vm426 = vcmp.gt.f32.partialorder %v380, 0.0
  %vm427 = vcmp.gt.f32.partialorder %v422, 0.0
  %vm428 = vcmp.gt.f32.partialorder %v382, 0.0
  %vm429 = vcmp.gt.f32.partialorder %v424, 0.0
  %v430 = vmul.f32 %v380, 0.2
  %v431 = vmul.f32 %v422, 0.2
  %v432 = vmul.f32 %v382, 0.2
  %v433 = vmul.f32 %v424, 0.2
  %v434 = vsel %vm426, %v380, %v430
  %v435 = vsel %vm427, %v422, %v431
  %v436 = vsel %vm428, %v382, %v432
  %v437 = vsel %vm429, %v424, %v433
  %v438 = vpack.c.bf16 %v436, %v434
  %v439 = vpack.c.bf16 %v437, %v435
  %v440 = vld [vmem:[%s3] sm:$0xf]
  %v441 = vld [vmem:[%s3 + $0x4] sm:$0xf]
  %v442 = vld [vmem:[%s3 + $0x8] sm:$0xf]
  %v443 = vld [vmem:[%s3 + $0xc] sm:$0xf]
  %v444 = vld [vmem:[%s3 + $0x10] sm:$0xf]
  %v445 = vld [vmem:[%s3 + $0x14] sm:$0xf]
  %v446 = vld [vmem:[%s3 + $0x18] sm:$0xf]
  %v447 = vld [vmem:[%s3 + $0x1c] sm:$0xf]
  %v448 = vld [vmem:[%s3 + $0x20] sm:$0xf]
  %v449 = vld [vmem:[%s3 + $0x24] sm:$0xf]
  %v450 = vld [vmem:[%s3 + $0x28] sm:$0xf]
  %v451 = vld [vmem:[%s3 + $0x2c] sm:$0xf]
  %v452 = vld [vmem:[%s3 + $0x30] sm:$0xf]
  %v453 = vld [vmem:[%s3 + $0x34] sm:$0xf]
  %v454 = vld [vmem:[%s3 + $0x38] sm:$0xf]
  %v455 = vld [vmem:[%s3 + $0x3c] sm:$0xf]
  %v456 = vld [vmem:[%s3 + $0x40] sm:$0xf]
  %v457 = vld [vmem:[%s3 + $0x44] sm:$0xf]
  %v458 = vld [vmem:[%s3 + $0x48] sm:$0xf]
  %v459 = vld [vmem:[%s3 + $0x4c] sm:$0xf]
  %v460 = vld [vmem:[%s3 + $0x50] sm:$0xf]
  %v461 = vld [vmem:[%s3 + $0x54] sm:$0xf]
  %v462 = vld [vmem:[%s3 + $0x58] sm:$0xf]
  %v463 = vld [vmem:[%s3 + $0x5c] sm:$0xf]
  %v464 = vld [vmem:[%s3 + $0x60] sm:$0xf]
  %v465 = vld [vmem:[%s3 + $0x64] sm:$0xf]
  %v466 = vld [vmem:[%s3 + $0x68] sm:$0xf]
  %v467 = vld [vmem:[%s3 + $0x6c] sm:$0xf]
  %v468 = vld [vmem:[%s3 + $0x70] sm:$0xf]
  %v469 = vld [vmem:[%s3 + $0x74] sm:$0xf]
  %v470 = vld [vmem:[%s3 + $0x78] sm:$0xf]
  %v471 = vld [vmem:[%s3 + $0x7c] sm:$0xf]
  %v472 = vld [vmem:[%s4] sm:$0x1]
  %v474 = vperm.slane %v472, 0
  %v508 = vunpack.c.l.b16 %v440
  %v509 = vunpack.c.l.b16 %v441
  %v510 = vunpack.c.l.b16 %v442
  %v511 = vunpack.c.l.b16 %v443
  %v512 = vunpack.c.l.b16 %v444
  %v513 = vunpack.c.l.b16 %v445
  %v514 = vunpack.c.l.b16 %v446
  %v515 = vunpack.c.l.b16 %v447
  %v516 = vunpack.c.l.b16 %v448
  %v517 = vunpack.c.l.b16 %v449
  %v518 = vunpack.c.l.b16 %v450
  %v519 = vunpack.c.l.b16 %v451
  %v520 = vunpack.c.l.b16 %v452
  %v521 = vunpack.c.l.b16 %v453
  %v522 = vunpack.c.l.b16 %v454
  %v523 = vunpack.c.l.b16 %v455
  %v524 = vunpack.c.l.b16 %v456
  %v525 = vunpack.c.l.b16 %v457
  %v526 = vunpack.c.l.b16 %v458
  %v527 = vunpack.c.l.b16 %v459
  %v528 = vunpack.c.l.b16 %v460
  %v529 = vunpack.c.l.b16 %v461
  %v530 = vunpack.c.l.b16 %v462
  %v531 = vunpack.c.l.b16 %v463
  %v532 = vunpack.c.l.b16 %v464
  %v533 = vunpack.c.l.b16 %v465
  %v534 = vunpack.c.l.b16 %v466
  %v535 = vunpack.c.l.b16 %v467
  %v536 = vunpack.c.l.b16 %v468
  %v537 = vunpack.c.l.b16 %v469
  %v538 = vunpack.c.l.b16 %v470
  %v539 = vunpack.c.l.b16 %v471
  %v540 = vpack.c.b16 %v509, %v508
  %v541 = vpack.c.b16 %v511, %v510
  %v542 = vpack.c.b16 %v513, %v512
  %v543 = vpack.c.b16 %v515, %v514
  %v544 = vpack.c.b16 %v517, %v516
  %v545 = vpack.c.b16 %v519, %v518
  %v546 = vpack.c.b16 %v521, %v520
  %v547 = vpack.c.b16 %v523, %v522
  %v548 = vpack.c.b16 %v525, %v524
  %v549 = vpack.c.b16 %v527, %v526
  %v550 = vpack.c.b16 %v529, %v528
  %v551 = vpack.c.b16 %v531, %v530
  %v552 = vpack.c.b16 %v533, %v532
  %v553 = vpack.c.b16 %v535, %v534
  %v554 = vpack.c.b16 %v537, %v536
  %v555 = vpack.c.b16 %v539, %v538
  %572 = vmatpush.bf16.msra.mxu0 %v547
  %573 = vmatpush.bf16.msra.mxu0 %v546
  %574 = vmatpush.bf16.msra.mxu0 %v545
  %575 = vmatpush.bf16.msra.mxu0 %v544
  %576 = vmatpush.bf16.msra.mxu0 %v543
  %577 = vmatpush.bf16.msra.mxu0 %v542
  %578 = vmatpush.bf16.msra.mxu0 %v541
  %579 = vmatpush.bf16.msra.mxu0 %v540
  %580 = vmatmul.bf16.gmra.mxu0 %v438
  %v581 = vpop.f32.mrf.mxu0
  %v582 = vadd.f32 %v474, %v581
  %v583 = vpop.f32.mrf.mxu0
  %v584 = vadd.f32 %v474, %v583
  %585 = vdwg.mxu0
  %586 = vmatpush.bf16.msra.mxu0 %v555
  %587 = vmatpush.bf16.msra.mxu0 %v554
  %588 = vmatpush.bf16.msra.mxu0 %v553
  %589 = vmatpush.bf16.msra.mxu0 %v552
  %590 = vmatpush.bf16.msra.mxu0 %v551
  %591 = vmatpush.bf16.msra.mxu0 %v550
  %592 = vmatpush.bf16.msra.mxu0 %v549
  %593 = vmatpush.bf16.msra.mxu0 %v548
  %594 = vmatmul.bf16.gmra.mxu0 %v439
  %v595 = vpop.f32.mrf.mxu0
  %v596 = vadd.f32 %v582, %v595
  %v597 = vpop.f32.mrf.mxu0
  %v598 = vadd.f32 %v584, %v597
  %599 = vdwg.mxu0
  %vm600 = vcmp.gt.f32.partialorder %v596, 0.0
  %vm601 = vcmp.gt.f32.partialorder %v598, 0.0
  %v602 = vmul.f32 %v596, 0.2
  %v603 = vmul.f32 %v598, 0.2
  %v604 = vsel %vm600, %v596, %v602
  %v605 = vsel %vm601, %v598, %v603
  %v606 = vld [vmem:[%s5] sm:$0x1]
  %v608 = vperm.slane %v606, 0
  %v610 = vmul.f32 %v604, %v608
  %v611 = vmul.f32 %v605, %v608
  %612 = vadd.xlane.f32.xlu0 %v610
  %v613 = vpop.xlane.xlu0 %612
  %614 = vadd.xlane.f32.xlu0 %v611
  %v615 = vpop.xlane.xlu0 %614
  %v616 = vld [vmem:[#allocation2] sm:$0x1]
  %v618 = vperm.slane %v616, 0
  %v620 = vadd.f32 %v613, %v618
  %v621 = vadd.f32 %v615, %v618
  %vm622 = vcmask 7168
  %623 = vst.msk [vmem:[%s7] sm:$0xff] %vm622, %v620
  %624 = vst.msk [vmem:[%s7 + $0x8] sm:$0xff] %vm622, %v621
  // Predicated region
  $region30: #{discriminator_forward.1} parent=0 // pred_check
    _
  $region31: #{discriminator_forward.1} parent=0 // pred_check_branch
    %626 = sbr.rel (0) target = $region33
  $region32: #{discriminator_forward.1} parent=0 // pred_region
    _
  $region33: #{discriminator_forward.1} parent=0 // pred_fallthru
    _
  // Predicated region
  $region34: #{discriminator_forward.1} parent=0 // pred_check
    _
  $region35: #{discriminator_forward.1} parent=0 // pred_check_branch
    %628 = sbr.rel (0) target = $region37
  $region36: #{discriminator_forward.1} parent=0 // pred_region
    _
  $region37: #{discriminator_forward.1} parent=0 // pred_fallthru
    _

</llo_original>
